<compile_context>
chip_gen: v5e
topology: v5e:2x2
jax: 0.10.0
libtpu: 0.0.40
codegen_flags: <defaults>
</compile_context>

<pallas_src>
import jax
import jax.numpy as jnp
from jax.experimental import pallas as pl
from jax.experimental.pallas import tpu as pltpu


_TARGET_X_BLOCK_BYTES = 2 * 1024 * 1024  # per x/out block (double-buffered by Pallas)


def _add_pe_kernel(x_ref, pe_ref, o_ref):
    # x_ref/o_ref: (B, tN) tile of the flattened activations
    # pe_ref:      (1, tN) tile of the flattened positional table
    o_ref[...] = (x_ref[...] + pe_ref[...]).astype(o_ref.dtype)


def _choose_lane_tile(N, B, itemsize, block_bytes):
    """Pick a lane-dense tile size along the flattened T*D axis."""
    if N % 128 != 0:
        # Not lane-tileable; use the full row (block dim == full array dim is legal).
        return N
    target = block_bytes // (itemsize * max(B, 1))
    target = max(128, (target // 128) * 128)
    if target >= N:
        return N
    # Prefer a tile that divides N evenly (no ragged edge block).
    for cand in range(target, 127, -128):
        if N % cand == 0:
            return cand
    return target  # ragged final block; Pallas masks out-of-range writes


def learnable_positional_encoding(x, pe, *, block_bytes=_TARGET_X_BLOCK_BYTES):
    """x: (B, T, D); pe: (max_length, D). Returns x + pe[:T]."""
    B, T, D = x.shape
    max_length, D_pe = pe.shape
    assert D_pe == D, f"embed_dim mismatch: x has {D}, pe has {D_pe}"
    assert T <= max_length, f"sequence length {T} exceeds max_length {max_length}"

    N = T * D
    # Reshapes of contiguous row-major arrays are layout no-ops (pure glue).
    x2 = x.reshape(B, N)
    pe2 = pe[:T].reshape(1, N)

    itemsize = x.dtype.itemsize
    tN = _choose_lane_tile(N, B, itemsize, block_bytes)
    grid = (pl.cdiv(N, tN),)

    out2 = pl.pallas_call(
        _add_pe_kernel,
        out_shape=jax.ShapeDtypeStruct((B, N), x.dtype),
        grid_spec=pltpu.PrefetchScalarGridSpec(
            num_scalar_prefetch=0,
            grid=grid,
            in_specs=[
                pl.BlockSpec((B, tN), lambda t: (0, t)),   # x tile
                pl.BlockSpec((1, tN), lambda t: (0, t)),   # pe tile
            ],
            out_specs=pl.BlockSpec((B, tN), lambda t: (0, t)),
        ),
        compiler_params=pltpu.CompilerParams(
            # 1D grid; "parallel" lets Mosaic shard tiles across both TCs on v7x
            # (no-op on single-TC v5e/v6e).
            dimension_semantics=("parallel",),
            # Safe on all generations (<= v7x's 64 MiB physical VMEM); ample
            # headroom for double-buffered ~2 MiB blocks.
            vmem_limit_bytes=32 * 1024 * 1024,
        ),
        cost_estimate=pl.CostEstimate(
            flops=B * N,
            transcendentals=0,
            bytes_accessed=(2 * B * N + N) * itemsize,  # read x + pe, write out
        ),
    )(x2, pe2)

    return out2.reshape(B, T, D)


def _reference(x, pe):
    return x + pe[: x.shape[1]][None, :, :]


if __name__ == "__main__":
    key = jax.random.PRNGKey(0)
    k_x, k_pe = jax.random.split(key)

    # --- Primary check: module-consistent small shapes (single lane-dense block). ---
    B, T, D = 2, 8, 32
    max_length = 1000
    x = jax.random.normal(k_x, (B, T, D), dtype=jnp.float32)
    # nn.init.uniform_(self.pe, -0.02, 0.02): deterministic synthetic init.
    pe = jax.random.uniform(
        k_pe, (max_length, D), minval=-0.02, maxval=0.02, dtype=jnp.float32
    )
    out = learnable_positional_encoding(x, pe)
    out = jax.block_until_ready(out)
    assert out.shape == (B, T, D)
    assert jnp.allclose(out, _reference(x, pe), atol=1e-6), "mismatch (primary)"

    # --- Secondary check: force the multi-tile path with a tiny block budget. ---
    B2, T2, D2 = 2, 16, 96  # N = 1536 (multiple of 128); small budget -> multiple tiles
    x2 = jax.random.normal(k_x, (B2, T2, D2), dtype=jnp.float32)
    pe2 = jax.random.uniform(
        k_pe, (max_length, D2), minval=-0.02, maxval=0.02, dtype=jnp.float32
    )
    out2 = learnable_positional_encoding(x2, pe2, block_bytes=4096)
    out2 = jax.block_until_ready(out2)
    assert jnp.allclose(out2, _reference(x2, pe2), atol=1e-6), "mismatch (tiled)"

    # --- Tertiary check: N not a multiple of 128 falls back to full-row blocks. ---
    B3, T3, D3 = 2, 9, 32  # N = 288
    x3 = jax.random.normal(k_x, (B3, T3, D3), dtype=jnp.float32)
    pe3 = jax.random.uniform(
        k_pe, (max_length, D3), minval=-0.02, maxval=0.02, dtype=jnp.float32
    )
    out3 = learnable_positional_encoding(x3, pe3)
    out3 = jax.block_until_ready(out3)
    assert jnp.allclose(out3, _reference(x3, pe3), atol=1e-6), "mismatch (ragged N)"

    print("KERNEL_OK")
</pallas_src>

<mosaic_0001>
module attributes {stable_mosaic.version = 11 : i64} {
  func.func @_add_pe_kernel(%arg0: i32, %arg1: memref<2x256xf32, #tpu.memory_space<vmem>>, %arg2: memref<1x256xf32, #tpu.memory_space<vmem>>, %arg3: memref<2x256xf32, #tpu.memory_space<vmem>>) attributes {dimension_semantics = [#tpu.dimension_semantics<parallel>], iteration_bounds = array<i64: 1>, scalar_prefetch = 0 : i64, scratch_operands = 0 : i64, tpu.core_type = #tpu.core_type<tc>, window_params = [{transform_indices = @transform_0, window_bounds = array<i64: 2, 256>}, {transform_indices = @transform_1, window_bounds = array<i64: 1, 256>}, {transform_indices = @transform_2, window_bounds = array<i64: 2, 256>}]} {
    %c0 = arith.constant 0 : index
    %c0_0 = arith.constant 0 : index
    %0 = vector.load %arg1[%c0, %c0_0] : memref<2x256xf32, #tpu.memory_space<vmem>>, vector<2x256xf32>
    %c0_1 = arith.constant 0 : index
    %c0_2 = arith.constant 0 : index
    %1 = vector.load %arg2[%c0_1, %c0_2] : memref<1x256xf32, #tpu.memory_space<vmem>>, vector<1x256xf32>
    %2 = vector.broadcast %1 : vector<1x256xf32> to vector<2x256xf32>
    %3 = arith.addf %0, %2 : vector<2x256xf32>
    %c0_3 = arith.constant 0 : index
    %c0_4 = arith.constant 0 : index
    %4 = vector.load %arg3[%c0_3, %c0_4] : memref<2x256xf32, #tpu.memory_space<vmem>>, vector<2x256xf32>
    tpu.vector_store %arg3[%c0_3, %c0_4], %3 {strides = array<i32>} : memref<2x256xf32, #tpu.memory_space<vmem>>, vector<2x256xf32>,
    return
  }
  func.func @transform_0(%arg0: i32) -> (i32, i32) {
    %c0_i32 = arith.constant 0 : i32
    %c0_i32_0 = arith.constant 0 : i32
    return %c0_i32, %arg0 : i32, i32
  }
  func.func @transform_1(%arg0: i32) -> (i32, i32) {
    %c0_i32 = arith.constant 0 : i32
    %c0_i32_0 = arith.constant 0 : i32
    return %c0_i32, %arg0 : i32, i32
  }
  func.func @transform_2(%arg0: i32) -> (i32, i32) {
    %c0_i32 = arith.constant 0 : i32
    %c0_i32_0 = arith.constant 0 : i32
    return %c0_i32, %arg0 : i32, i32
  }
}

</mosaic_0001>

<llo_original>
// kernel: tpu_custom_call.1
$region0: #{tpu_custom_call.1}
  #allocation0 [shape = 'u32[]', space=smem, size = 0x4, offset = 0x4, fixed_abs, tag = 'smem constant byte address 0x4 - core index']
  #allocation1 [shape = 'u32[72,128]{1,0:T(1,128)}', space=vmem, size = 0x9000, scoped, tag = 'internal scratch']
  %s0 = inlined_call_operand.hbm [shape: f32[2,256], index: 0, kind: input, shape index: {}]
  %s1 = inlined_call_operand.hbm [shape: f32[1,256], index: 1, kind: input, shape index: {}]
  %s2 = inlined_call_operand.hbm [shape: f32[2,256], index: 2, kind: output, shape index: {}]
  %s3 = sld [smem:[#allocation0]]
  $region26: #{tpu_custom_call.1} parent=0
    _
  %s5 = ssub.s32 1, %s3
  %s6 = scalar_select 0, %s5, %s3
  $region1: #{tpu_custom_call.1} parent=0
    #allocation2 [shape = 'u8[2048]{0}', space=vmem, size = 0x800, scoped, tag = 'input window, operand 0, single buffered']
    #allocation3 [shape = 's32[1]{0}', space=sflag, size = 0x4, scoped, tag = 'scoped memory for tpu_custom_call.1']
    #allocation4 [shape = 's32[1]{0}', space=sflag, size = 0x4, scoped, tag = 'scoped memory for tpu_custom_call.1']
    #allocation5 [shape = 'u8[1024]{0}', space=vmem, size = 0x400, scoped, tag = 'input window, operand 1, single buffered']
    #allocation6 [shape = 's32[1]{0}', space=sflag, size = 0x4, scoped, tag = 'scoped memory for tpu_custom_call.1']
    #allocation7 [shape = 'u8[2048]{0}', space=vmem, size = 0x800, scoped, tag = 'output window, operand 0, single buffered']
    %7 = vsyncpa [#allocation3], 0
    %8 = vsyncpa [#allocation6], 0
    %9 = vsyncpa [#allocation4], 0
    // Predicated region
    $region2: #{tpu_custom_call.1} parent=1 // pred_check
      _
    $region3: #{tpu_custom_call.1} parent=1 // pred_check_branch
      %11 = sbr.rel (0) target = $region5
    $region4: #{tpu_custom_call.1} parent=1 // pred_region
      %13 = vsyncadd [#allocation3], 0
      %s15 = sshll.u32 %s0, 4
      %s16 = int_to_ptr.hbm [resolvable:$true] %s15
      %s17 = sshll.u32 [#allocation2], 4
      %s18 = int_to_ptr.vmem [resolvable:$true] %s17
      %20 = dma.hbm_to_vmem [thread:$0]  %s16, 64, %s18, [#allocation3]
    $region5: #{tpu_custom_call.1} parent=1 // pred_fallthru
      _
    // Predicated region
    $region6: #{tpu_custom_call.1} parent=1 // pred_check
      _
    $region7: #{tpu_custom_call.1} parent=1 // pred_check_branch
      %22 = sbr.rel (0) target = $region9
    $region8: #{tpu_custom_call.1} parent=1 // pred_region
      %24 = vsyncadd [#allocation6], 0
      %s26 = sshll.u32 %s1, 4
      %s27 = int_to_ptr.hbm [resolvable:$true] %s26
      %s28 = sshll.u32 [#allocation5], 4
      %s29 = int_to_ptr.vmem [resolvable:$true] %s28
      %31 = dma.hbm_to_vmem [thread:$0]  %s27, 32, %s29, [#allocation6]
    $region9: #{tpu_custom_call.1} parent=1 // pred_fallthru
      _
    // Predicated region
    $region10: #{tpu_custom_call.1} parent=1 // pred_check
      _
    $region11: #{tpu_custom_call.1} parent=1 // pred_check_branch
      %33 = sbr.rel (0) target = $region13
    $region12: #{tpu_custom_call.1} parent=1 // pred_region
      %35 = dma.done [#allocation3], 64
    $region13: #{tpu_custom_call.1} parent=1 // pred_fallthru
      _
    // Predicated region
    $region14: #{tpu_custom_call.1} parent=1 // pred_check
      _
    $region15: #{tpu_custom_call.1} parent=1 // pred_check_branch
      %37 = sbr.rel (0) target = $region17
    $region16: #{tpu_custom_call.1} parent=1 // pred_region
      %39 = dma.done [#allocation6], 32
    $region17: #{tpu_custom_call.1} parent=1 // pred_fallthru
      _
    %v40 = vld [vmem:[#allocation2] sm:$0xf]
    %v41 = vld [vmem:[#allocation5] sm:$0x3]
    %v43 = vperm.slane %v41, 0
    %v44 = vperm.slane %v41, 1
    %v45 = vrot.slane %v44, 6
    %vm46 = vcmask 1041408
    %v47 = vsel %vm46, %v43, %v45
    %v49 = vadd.f32 %v40, %v47
    %50 = vst [vmem:[#allocation7] sm:$0xf] %v49
    // Predicated region
    $region18: #{tpu_custom_call.1} parent=1 // pred_check
      _
    $region19: #{tpu_custom_call.1} parent=1 // pred_check_branch
      %52 = sbr.rel (0) target = $region21
    $region20: #{tpu_custom_call.1} parent=1 // pred_region
      %54 = vsyncadd [#allocation4], 0
      %s56 = sshll.u32 [#allocation7], 4
      %s57 = int_to_ptr.vmem [resolvable:$true] %s56
      %s58 = sshll.u32 %s2, 4
      %s59 = int_to_ptr.hbm [resolvable:$true] %s58
      %61 = dma.vmem_to_hbm [thread:$0]  %s57, 64, %s59, [#allocation4]
    $region21: #{tpu_custom_call.1} parent=1 // pred_fallthru
      _
    // Predicated region
    $region22: #{tpu_custom_call.1} parent=1 // pred_check
      _
    $region23: #{tpu_custom_call.1} parent=1 // pred_check_branch
      %63 = sbr.rel (0) target = $region25
    $region24: #{tpu_custom_call.1} parent=1 // pred_region
      %65 = dma.done [#allocation4], 64
    $region25: #{tpu_custom_call.1} parent=1 // pred_fallthru
      _
    %66 = vsyncpa [#allocation3], 1
    %67 = vsyncpa [#allocation6], 1
    %68 = vsyncpa [#allocation4], 1

</llo_original>
